<compile_context>
chip_gen: v5e
topology: v5e:2x2
jax: 0.10.0
libtpu: 0.0.40
codegen_flags: <defaults>
</compile_context>

<pallas_src>
import jax
import jax.numpy as jnp
from jax.experimental import pallas as pl
from jax.experimental.pallas import tpu as pltpu

HIDDEN = 64


def pinn_mlp_kernel(x_ref, t_ref, w1_ref, b1_ref, w2_ref, b2_ref, w3t_ref,
                    b3_ref, out_ref):
    """One batch-tile (batch in lanes) of the PINN MLP forward pass.

    x_ref  : (1, tm)      collocation points x
    t_ref  : (1, tm)      collocation points t
    w1_ref : (64, 2)      PyTorch layout (out, in), f32
    b1_ref : (64, 1)      f32
    w2_ref : (64, 64)     f32 (v5e) or bf16 (v6e/v7x)
    b2_ref : (64, 1)      f32
    w3t_ref: (64, 1)      W3 transposed (layer 3 runs on VPU/XLU, not MXU)
    b3_ref : (1, 1)       f32
    out_ref: (1, tm)      lane-dense output tile
    """
    x = x_ref[...]                                  # (1, tm)
    t = t_ref[...]                                  # (1, tm)

    w1 = w1_ref[...]                                # (64, 2)
    b1 = b1_ref[...]                                # (64, 1)
    b2 = b2_ref[...]                                # (64, 1)
    w3t = w3t_ref[...]                              # (64, 1)
    b3 = b3_ref[...]                                # (1, 1)

    # Layer 1: K=2 contraction as two broadcast FMAs on the VPU (no MXU pass).
    h1 = jnp.tanh(w1[:, 0:1] * x + w1[:, 1:2] * t + b1)        # (64, tm) f32

    # Layer 2: 64x64 matmul on the MXU, f32 accumulation.  If the wrapper
    # pre-cast W2 to bf16 (v6e/v7x), feed the activation in bf16 too.
    h1_mm = h1.astype(w2_ref.dtype)
    z2 = jnp.dot(w2_ref[...], h1_mm,
                 preferred_element_type=jnp.float32) + b2       # (64, tm) f32
    h2 = jnp.tanh(z2)                                           # (64, tm) f32

    # Layer 3: M=1 output row -> VPU multiply + XLU sublane reduction instead
    # of a wasteful (1,64)@(64,tm) MXU pass.
    out = jnp.sum(w3t * h2, axis=0, keepdims=True) + b3         # (1, tm)
    out_ref[...] = out.astype(out_ref.dtype)


def _tpu_generation():
    """Best-effort TPU generation detection (0 if unknown / not a TPU)."""
    try:
        kind = jax.devices()[0].device_kind.lower()
    except Exception:
        return 0
    if "v7" in kind or "7x" in kind:
        return 7
    if "v6" in kind:
        return 6
    if "v5" in kind:
        return 5
    if "v4" in kind:
        return 4
    return 0


def _choose_tile(n, tm_req):
    """Pick a batch tile (multiple of 128) and the padded batch size.

    For moderate/large N the grid gets at least 2 steps so the "parallel"
    batch axis can be sharded across both v7x TensorCores."""
    n128 = ((n + 127) // 128) * 128
    tm_req = max(128, (tm_req // 128) * 128)
    if n128 <= 128:
        tm = 128
    else:
        tm = min(tm_req, max(128, ((n128 // 2) // 128) * 128))
    n_pad = ((n128 + tm - 1) // tm) * tm
    return tm, n_pad


def pinn_forward(x, t, params, *, tm=None, use_bf16=None):
    """x, t: (N, 1) float32.  Returns (N, 1) float32."""
    w1, b1, w2, b2, w3, b3 = params
    n = x.shape[0]

    gen = _tpu_generation()
    if use_bf16 is None:
        use_bf16 = gen >= 6              # bf16 matmul only on v6e / v7x
    if tm is None:
        tm = 16384 if gen >= 6 else 8192  # VMEM-safe defaults per generation

    tm, n_pad = _choose_tile(n, tm)

    # Batch in the lane dimension: (N, 1) -> (1, N) is a free reshape.
    x_row = x.reshape(1, n)
    t_row = t.reshape(1, n)
    if n_pad != n:
        x_row = jnp.pad(x_row, ((0, 0), (0, n_pad - n)))
        t_row = jnp.pad(t_row, ((0, 0), (0, n_pad - n)))

    w2_mm = w2.astype(jnp.bfloat16) if use_bf16 else w2
    w3t = w3.reshape(HIDDEN, 1)          # (1,64) -> (64,1) column for VPU layer 3

    grid = (n_pad // tm,)

    # Weight / bias blocks are the full arrays (index map pinned to block 0,0).
    def full(arr):
        return pl.BlockSpec(arr.shape, lambda i: (0, 0))

    weight_bytes = 4 * (w1.size + b1.size + w2.size + b2.size + w3.size + b3.size)
    cost = pl.CostEstimate(
        flops=int(2 * n_pad * (2 * HIDDEN + HIDDEN * HIDDEN + HIDDEN)),
        transcendentals=int(2 * HIDDEN * n_pad),
        bytes_accessed=int(12 * n_pad + weight_bytes),
    )

    out_row = pl.pallas_call(
        pinn_mlp_kernel,
        out_shape=jax.ShapeDtypeStruct((1, n_pad), jnp.float32),
        grid_spec=pltpu.PrefetchScalarGridSpec(
            num_scalar_prefetch=0,
            grid=grid,
            in_specs=[
                pl.BlockSpec((1, tm), lambda i: (0, i)),   # x tile
                pl.BlockSpec((1, tm), lambda i: (0, i)),   # t tile
                full(w1), full(b1),
                full(w2_mm), full(b2),
                full(w3t), full(b3),
            ],
            out_specs=pl.BlockSpec((1, tm), lambda i: (0, i)),
        ),
        compiler_params=pltpu.CompilerParams(
            dimension_semantics=("parallel",)),
        cost_estimate=cost,
    )(x_row, t_row, w1, b1, w2_mm, b2, w3t, b3)

    return out_row[0, :n].reshape(n, 1)


def init_params(key):
    """Deterministic init mimicking nn.Linear default (uniform(-k, k), k=1/sqrt(fan_in)).

    Weights in PyTorch layout (out_features, in_features); biases (out, 1)."""
    def linear(key, fan_in, fan_out):
        kw, kb = jax.random.split(key)
        bound = 1.0 / jnp.sqrt(fan_in)
        w = jax.random.uniform(kw, (fan_out, fan_in), jnp.float32,
                               minval=-bound, maxval=bound)
        b = jax.random.uniform(kb, (fan_out, 1), jnp.float32,
                               minval=-bound, maxval=bound)
        return w, b

    k1, k2, k3 = jax.random.split(key, 3)
    w1, b1 = linear(k1, 2, HIDDEN)
    w2, b2 = linear(k2, HIDDEN, HIDDEN)
    w3, b3 = linear(k3, HIDDEN, 1)
    return (w1, b1, w2, b2, w3, b3)


def reference_forward(x, t, params):
    """Plain-JAX reference for correctness checking (PyTorch semantics)."""
    w1, b1, w2, b2, w3, b3 = params
    inp = jnp.concatenate([x, t], axis=1)                   # (N, 2)
    h1 = jnp.tanh(inp @ w1.T + b1.T)                        # (N, 64)
    h2 = jnp.tanh(h1 @ w2.T + b2.T)                         # (N, 64)
    return h2 @ w3.T + b3.T                                 # (N, 1)


if __name__ == "__main__":
    key = jax.random.PRNGKey(0)
    kp, kx, kt = jax.random.split(key, 3)

    N = 16  # small batch of collocation points
    params = init_params(kp)
    x = jax.random.uniform(kx, (N, 1), jnp.float32, minval=-1.0, maxval=1.0)
    t = jax.random.uniform(kt, (N, 1), jnp.float32, minval=0.0, maxval=1.0)

    out = pinn_forward(x, t, params)
    out = jax.block_until_ready(out)

    ref = reference_forward(x, t, params)
    assert out.shape == (N, 1), out.shape

    # bf16 matmul path on v6e/v7x needs a looser tolerance vs the f32 reference.
    tol = 2e-2 if _tpu_generation() >= 6 else 1e-5
    assert jnp.allclose(out, ref, atol=tol, rtol=tol), "mismatch vs reference"

    print("KERNEL_OK")
</pallas_src>

<mosaic_0001>
module attributes {stable_mosaic.version = 11 : i64} {
  func.func @pinn_mlp_kernel(%arg0: i32, %arg1: memref<1x128xf32, #tpu.memory_space<vmem>>, %arg2: memref<1x128xf32, #tpu.memory_space<vmem>>, %arg3: memref<64x2xf32, #tpu.memory_space<vmem>>, %arg4: memref<64x1xf32, #tpu.memory_space<vmem>>, %arg5: memref<64x64xf32, #tpu.memory_space<vmem>>, %arg6: memref<64x1xf32, #tpu.memory_space<vmem>>, %arg7: memref<64x1xf32, #tpu.memory_space<vmem>>, %arg8: memref<1x1xf32, #tpu.memory_space<vmem>>, %arg9: memref<1x128xf32, #tpu.memory_space<vmem>>) attributes {dimension_semantics = [#tpu.dimension_semantics<parallel>], iteration_bounds = array<i64: 1>, scalar_prefetch = 0 : i64, scratch_operands = 0 : i64, tpu.core_type = #tpu.core_type<tc>, window_params = [{transform_indices = @transform_0, window_bounds = array<i64: 1, 128>}, {transform_indices = @transform_1, window_bounds = array<i64: 1, 128>}, {pipeline_mode = #tpu.pipeline_mode<synchronous>, transform_indices = @transform_2, window_bounds = array<i64: 64, 2>}, {pipeline_mode = #tpu.pipeline_mode<synchronous>, transform_indices = @transform_3, window_bounds = array<i64: 64, 1>}, {pipeline_mode = #tpu.pipeline_mode<synchronous>, transform_indices = @transform_4, window_bounds = array<i64: 64, 64>}, {pipeline_mode = #tpu.pipeline_mode<synchronous>, transform_indices = @transform_5, window_bounds = array<i64: 64, 1>}, {pipeline_mode = #tpu.pipeline_mode<synchronous>, transform_indices = @transform_6, window_bounds = array<i64: 64, 1>}, {pipeline_mode = #tpu.pipeline_mode<synchronous>, transform_indices = @transform_7, window_bounds = array<i64: 1, 1>}, {transform_indices = @transform_8, window_bounds = array<i64: 1, 128>}]} {
    %c0 = arith.constant 0 : index
    %c0_0 = arith.constant 0 : index
    %0 = vector.load %arg1[%c0, %c0_0] : memref<1x128xf32, #tpu.memory_space<vmem>>, vector<1x128xf32>
    %c0_1 = arith.constant 0 : index
    %c0_2 = arith.constant 0 : index
    %1 = vector.load %arg2[%c0_1, %c0_2] : memref<1x128xf32, #tpu.memory_space<vmem>>, vector<1x128xf32>
    %c0_3 = arith.constant 0 : index
    %c0_4 = arith.constant 0 : index
    %2 = vector.load %arg3[%c0_3, %c0_4] : memref<64x2xf32, #tpu.memory_space<vmem>>, vector<64x2xf32>
    %c0_5 = arith.constant 0 : index
    %c0_6 = arith.constant 0 : index
    %3 = vector.load %arg4[%c0_5, %c0_6] : memref<64x1xf32, #tpu.memory_space<vmem>>, vector<64x1xf32>
    %c0_7 = arith.constant 0 : index
    %c0_8 = arith.constant 0 : index
    %4 = vector.load %arg6[%c0_7, %c0_8] : memref<64x1xf32, #tpu.memory_space<vmem>>, vector<64x1xf32>
    %c0_9 = arith.constant 0 : index
    %c0_10 = arith.constant 0 : index
    %5 = vector.load %arg7[%c0_9, %c0_10] : memref<64x1xf32, #tpu.memory_space<vmem>>, vector<64x1xf32>
    %c0_11 = arith.constant 0 : index
    %c0_12 = arith.constant 0 : index
    %6 = vector.load %arg8[%c0_11, %c0_12] : memref<1x1xf32, #tpu.memory_space<vmem>>, vector<1x1xf32>
    %7 = vector.extract_strided_slice %2 {offsets = [0, 0], sizes = [64, 1], strides = [1, 1]} : vector<64x2xf32> to vector<64x1xf32>
    %8 = vector.broadcast %7 : vector<64x1xf32> to vector<64x128xf32>
    %9 = vector.broadcast %0 : vector<1x128xf32> to vector<64x128xf32>
    %10 = arith.mulf %8, %9 : vector<64x128xf32>
    %11 = vector.extract_strided_slice %2 {offsets = [0, 1], sizes = [64, 1], strides = [1, 1]} : vector<64x2xf32> to vector<64x1xf32>
    %12 = vector.broadcast %11 : vector<64x1xf32> to vector<64x128xf32>
    %13 = vector.broadcast %1 : vector<1x128xf32> to vector<64x128xf32>
    %14 = arith.mulf %12, %13 : vector<64x128xf32>
    %15 = arith.addf %10, %14 : vector<64x128xf32>
    %16 = vector.broadcast %3 : vector<64x1xf32> to vector<64x128xf32>
    %17 = arith.addf %15, %16 : vector<64x128xf32>
    %18 = math.tanh %17 : vector<64x128xf32>
    %c0_13 = arith.constant 0 : index
    %c0_14 = arith.constant 0 : index
    %19 = vector.load %arg5[%c0_13, %c0_14] : memref<64x64xf32, #tpu.memory_space<vmem>>, vector<64x64xf32>
    %cst = arith.constant dense<0.000000e+00> : vector<64x128xf32>
    %20 = tpu.matmul %19, %18, %cst {dimension_numbers = #tpu.dot_dimension_numbers<[1], [0], [0], [1], [0, 0, 1, 1], [], []>} : vector<64x64xf32>, vector<64x128xf32>, vector<64x128xf32> -> vector<64x128xf32>
    %21 = vector.broadcast %4 : vector<64x1xf32> to vector<64x128xf32>
    %22 = arith.addf %20, %21 : vector<64x128xf32>
    %23 = math.tanh %22 : vector<64x128xf32>
    %24 = vector.broadcast %5 : vector<64x1xf32> to vector<64x128xf32>
    %25 = arith.mulf %24, %23 : vector<64x128xf32>
    %cst_15 = arith.constant dense<0.000000e+00> : vector<128xf32>
    %26 = vector.multi_reduction <add>, %25, %cst_15 [0] : vector<64x128xf32> to vector<128xf32>
    %27 = vector.shape_cast %26 : vector<128xf32> to vector<1x128xf32>
    %28 = vector.broadcast %6 : vector<1x1xf32> to vector<1x128xf32>
    %29 = arith.addf %27, %28 : vector<1x128xf32>
    %c0_16 = arith.constant 0 : index
    %c0_17 = arith.constant 0 : index
    %30 = vector.load %arg9[%c0_16, %c0_17] : memref<1x128xf32, #tpu.memory_space<vmem>>, vector<1x128xf32>
    tpu.vector_store %arg9[%c0_16, %c0_17], %29 {strides = array<i32>} : memref<1x128xf32, #tpu.memory_space<vmem>>, vector<1x128xf32>,
    return
  }
  func.func @transform_0(%arg0: i32) -> (i32, i32) {
    %c0_i32 = arith.constant 0 : i32
    %c0_i32_0 = arith.constant 0 : i32
    return %c0_i32, %arg0 : i32, i32
  }
  func.func @transform_1(%arg0: i32) -> (i32, i32) {
    %c0_i32 = arith.constant 0 : i32
    %c0_i32_0 = arith.constant 0 : i32
    return %c0_i32, %arg0 : i32, i32
  }
  func.func @transform_2(%arg0: i32) -> (i32, i32) {
    %c0_i32 = arith.constant 0 : i32
    %c0_i32_0 = arith.constant 0 : i32
    %c0_i32_1 = arith.constant 0 : i32
    return %c0_i32, %c0_i32_0 : i32, i32
  }
  func.func @transform_3(%arg0: i32) -> (i32, i32) {
    %c0_i32 = arith.constant 0 : i32
    %c0_i32_0 = arith.constant 0 : i32
    %c0_i32_1 = arith.constant 0 : i32
    return %c0_i32, %c0_i32_0 : i32, i32
  }
  func.func @transform_4(%arg0: i32) -> (i32, i32) {
    %c0_i32 = arith.constant 0 : i32
    %c0_i32_0 = arith.constant 0 : i32
    %c0_i32_1 = arith.constant 0 : i32
    return %c0_i32, %c0_i32_0 : i32, i32
  }
  func.func @transform_5(%arg0: i32) -> (i32, i32) {
    %c0_i32 = arith.constant 0 : i32
    %c0_i32_0 = arith.constant 0 : i32
    %c0_i32_1 = arith.constant 0 : i32
    return %c0_i32, %c0_i32_0 : i32, i32
  }
  func.func @transform_6(%arg0: i32) -> (i32, i32) {
    %c0_i32 = arith.constant 0 : i32
    %c0_i32_0 = arith.constant 0 : i32
    %c0_i32_1 = arith.constant 0 : i32
    return %c0_i32, %c0_i32_0 : i32, i32
  }
  func.func @transform_7(%arg0: i32) -> (i32, i32) {
    %c0_i32 = arith.constant 0 : i32
    %c0_i32_0 = arith.constant 0 : i32
    %c0_i32_1 = arith.constant 0 : i32
    return %c0_i32, %c0_i32_0 : i32, i32
  }
  func.func @transform_8(%arg0: i32) -> (i32, i32) {
    %c0_i32 = arith.constant 0 : i32
    %c0_i32_0 = arith.constant 0 : i32
    return %c0_i32, %arg0 : i32, i32
  }
}

</mosaic_0001>

<llo_original>
// kernel: tpu_custom_call.1
$region0: #{tpu_custom_call.1}
  #allocation0 [shape = 'u32[]', space=smem, size = 0x4, offset = 0x4, fixed_abs, tag = 'smem constant byte address 0x4 - core index']
  #allocation1 [shape = 'u32[72,128]{1,0:T(1,128)}', space=vmem, size = 0x9000, scoped, tag = 'internal scratch']
  #allocation2 [shape = 'f32[1,1]{1,0:T(1,128)S(1)}', space=vmem, size = 0x200, scoped, tag = 'scoped memory for tpu_custom_call.1']
  %s0 = inlined_call_operand.vmem [shape: f32[1,128], index: 0, kind: input, shape index: {}]
  %s1 = inlined_call_operand.vmem [shape: f32[1,128], index: 1, kind: input, shape index: {}]
  %s2 = inlined_call_operand.vmem [shape: f32[64,2], index: 2, kind: input, shape index: {}]
  %s3 = inlined_call_operand.vmem [shape: f32[64,1], index: 3, kind: input, shape index: {}]
  %s4 = inlined_call_operand.vmem [shape: f32[64,64], index: 4, kind: input, shape index: {}]
  %s5 = inlined_call_operand.vmem [shape: f32[64,1], index: 5, kind: input, shape index: {}]
  %s6 = inlined_call_operand.vmem [shape: f32[64,1], index: 6, kind: input, shape index: {}]
  %s7 = inlined_call_operand.<no memory space> [shape: f32[1,1], index: 7, kind: input, shape index: {}]
  %s8 = inlined_call_operand.hbm [shape: f32[1,128], index: 8, kind: output, shape index: {}]
  %s9 = sld [smem:[#allocation0]]
  $region42: #{tpu_custom_call.1} parent=0
    _
  %s11 = ssub.s32 1, %s9
  %s12 = scalar_select 0, %s11, %s9
  %v13 = vstv %s7
  %14 = vst [vmem:[#allocation2] sm:$0x1] %v13
  $region1: #{tpu_custom_call.1} parent=0
    #allocation3 [shape = 'u8[512]{0}', space=vmem, size = 0x400, scoped, tag = 'output window, operand 0, single buffered']
    #allocation4 [shape = 's32[1]{0}', space=sflag, size = 0x4, scoped, tag = 'scoped memory for tpu_custom_call.1']
    %15 = vsyncpa [#allocation4], 0
    // Predicated region
    $region2: #{tpu_custom_call.1} parent=1 // pred_check
      _
    $region3: #{tpu_custom_call.1} parent=1 // pred_check_branch
      %17 = sbr.rel (0) target = $region5
    $region4: #{tpu_custom_call.1} parent=1 // pred_region
      _
    $region5: #{tpu_custom_call.1} parent=1 // pred_fallthru
      _
    // Predicated region
    $region6: #{tpu_custom_call.1} parent=1 // pred_check
      _
    $region7: #{tpu_custom_call.1} parent=1 // pred_check_branch
      %19 = sbr.rel (0) target = $region9
    $region8: #{tpu_custom_call.1} parent=1 // pred_region
      _
    $region9: #{tpu_custom_call.1} parent=1 // pred_fallthru
      _
    // Predicated region
    $region10: #{tpu_custom_call.1} parent=1 // pred_check
      _
    $region11: #{tpu_custom_call.1} parent=1 // pred_check_branch
      %21 = sbr.rel (0) target = $region13
    $region12: #{tpu_custom_call.1} parent=1 // pred_region
      _
    $region13: #{tpu_custom_call.1} parent=1 // pred_fallthru
      _
    // Predicated region
    $region14: #{tpu_custom_call.1} parent=1 // pred_check
      _
    $region15: #{tpu_custom_call.1} parent=1 // pred_check_branch
      %23 = sbr.rel (0) target = $region17
    $region16: #{tpu_custom_call.1} parent=1 // pred_region
      _
    $region17: #{tpu_custom_call.1} parent=1 // pred_fallthru
      _
    // Predicated region
    $region18: #{tpu_custom_call.1} parent=1 // pred_check
      _
    $region19: #{tpu_custom_call.1} parent=1 // pred_check_branch
      %25 = sbr.rel (0) target = $region21
    $region20: #{tpu_custom_call.1} parent=1 // pred_region
      _
    $region21: #{tpu_custom_call.1} parent=1 // pred_fallthru
      _
    // Predicated region
    $region22: #{tpu_custom_call.1} parent=1 // pred_check
      _
    $region23: #{tpu_custom_call.1} parent=1 // pred_check_branch
      %27 = sbr.rel (0) target = $region25
    $region24: #{tpu_custom_call.1} parent=1 // pred_region
      _
    $region25: #{tpu_custom_call.1} parent=1 // pred_fallthru
      _
    // Predicated region
    $region26: #{tpu_custom_call.1} parent=1 // pred_check
      _
    $region27: #{tpu_custom_call.1} parent=1 // pred_check_branch
      %29 = sbr.rel (0) target = $region29
    $region28: #{tpu_custom_call.1} parent=1 // pred_region
      _
    $region29: #{tpu_custom_call.1} parent=1 // pred_fallthru
      _
    // Predicated region
    $region30: #{tpu_custom_call.1} parent=1 // pred_check
      _
    $region31: #{tpu_custom_call.1} parent=1 // pred_check_branch
      %31 = sbr.rel (0) target = $region33
    $region32: #{tpu_custom_call.1} parent=1 // pred_region
      _
    $region33: #{tpu_custom_call.1} parent=1 // pred_fallthru
      _
    %v32 = vld [vmem:[%s0] sm:$0x1]
    %v33 = vld [vmem:[%s1] sm:$0x1]
    %v34 = vld [vmem:[%s2] sm:$0xff]
    %v35 = vld [vmem:[%s2 + $0x8] sm:$0xff]
    %v36 = vld [vmem:[%s2 + $0x10] sm:$0xff]
    %v37 = vld [vmem:[%s2 + $0x18] sm:$0xff]
    %v38 = vld [vmem:[%s2 + $0x20] sm:$0xff]
    %v39 = vld [vmem:[%s2 + $0x28] sm:$0xff]
    %v40 = vld [vmem:[%s2 + $0x30] sm:$0xff]
    %v41 = vld [vmem:[%s2 + $0x38] sm:$0xff]
    %v42 = vld [vmem:[%s3] sm:$0xff]
    %v43 = vld [vmem:[%s3 + $0x8] sm:$0xff]
    %v44 = vld [vmem:[%s3 + $0x10] sm:$0xff]
    %v45 = vld [vmem:[%s3 + $0x18] sm:$0xff]
    %v46 = vld [vmem:[%s3 + $0x20] sm:$0xff]
    %v47 = vld [vmem:[%s3 + $0x28] sm:$0xff]
    %v48 = vld [vmem:[%s3 + $0x30] sm:$0xff]
    %v49 = vld [vmem:[%s3 + $0x38] sm:$0xff]
    %v50 = vld [vmem:[%s5] sm:$0xff]
    %v51 = vld [vmem:[%s5 + $0x8] sm:$0xff]
    %v52 = vld [vmem:[%s5 + $0x10] sm:$0xff]
    %v53 = vld [vmem:[%s5 + $0x18] sm:$0xff]
    %v54 = vld [vmem:[%s5 + $0x20] sm:$0xff]
    %v55 = vld [vmem:[%s5 + $0x28] sm:$0xff]
    %v56 = vld [vmem:[%s5 + $0x30] sm:$0xff]
    %v57 = vld [vmem:[%s5 + $0x38] sm:$0xff]
    %v58 = vld [vmem:[%s6] sm:$0xff]
    %v59 = vld [vmem:[%s6 + $0x8] sm:$0xff]
    %v60 = vld [vmem:[%s6 + $0x10] sm:$0xff]
    %v61 = vld [vmem:[%s6 + $0x18] sm:$0xff]
    %v62 = vld [vmem:[%s6 + $0x20] sm:$0xff]
    %v63 = vld [vmem:[%s6 + $0x28] sm:$0xff]
    %v64 = vld [vmem:[%s6 + $0x30] sm:$0xff]
    %v65 = vld [vmem:[%s6 + $0x38] sm:$0xff]
    %v66 = vld [vmem:[#allocation2] sm:$0x1]
    %68 = vset.pattern.permute.xlu0 0
    %69 = vperm.xlu0 %68, %v34
    %v70 = vpop.permute.xlu0 %69
    %73 = vset.pattern.permute.xlu0 0
    %74 = vperm.xlu0 %73, %v35
    %v75 = vpop.permute.xlu0 %74
    %78 = vset.pattern.permute.xlu0 0
    %79 = vperm.xlu0 %78, %v36
    %v80 = vpop.permute.xlu0 %79
    %83 = vset.pattern.permute.xlu0 0
    %84 = vperm.xlu0 %83, %v37
    %v85 = vpop.permute.xlu0 %84
    %88 = vset.pattern.permute.xlu0 0
    %89 = vperm.xlu0 %88, %v38
    %v90 = vpop.permute.xlu0 %89
    %93 = vset.pattern.permute.xlu0 0
    %94 = vperm.xlu0 %93, %v39
    %v95 = vpop.permute.xlu0 %94
    %98 = vset.pattern.permute.xlu0 0
    %99 = vperm.xlu0 %98, %v40
    %v100 = vpop.permute.xlu0 %99
    %103 = vset.pattern.permute.xlu0 0
    %104 = vperm.xlu0 %103, %v41
    %v105 = vpop.permute.xlu0 %104
    %v108 = vperm.slane %v32, 0
    %v110 = vmul.f32 %v70, %v108
    %v111 = vmul.f32 %v75, %v108
    %v112 = vmul.f32 %v80, %v108
    %v113 = vmul.f32 %v85, %v108
    %v114 = vmul.f32 %v90, %v108
    %v115 = vmul.f32 %v95, %v108
    %v116 = vmul.f32 %v100, %v108
    %v117 = vmul.f32 %v105, %v108
    %118 = vset.pattern.permute.xlu0 1
    %119 = vperm.xlu0 %118, %v34
    %v120 = vpop.permute.xlu0 %119
    %122 = vset.pattern.permute.xlu0 1
    %123 = vperm.xlu0 %122, %v35
    %v124 = vpop.permute.xlu0 %123
    %126 = vset.pattern.permute.xlu0 1
    %127 = vperm.xlu0 %126, %v36
    %v128 = vpop.permute.xlu0 %127
    %130 = vset.pattern.permute.xlu0 1
    %131 = vperm.xlu0 %130, %v37
    %v132 = vpop.permute.xlu0 %131
    %134 = vset.pattern.permute.xlu0 1
    %135 = vperm.xlu0 %134, %v38
    %v136 = vpop.permute.xlu0 %135
    %138 = vset.pattern.permute.xlu0 1
    %139 = vperm.xlu0 %138, %v39
    %v140 = vpop.permute.xlu0 %139
    %142 = vset.pattern.permute.xlu0 1
    %143 = vperm.xlu0 %142, %v40
    %v144 = vpop.permute.xlu0 %143
    %146 = vset.pattern.permute.xlu0 1
    %147 = vperm.xlu0 %146, %v41
    %v148 = vpop.permute.xlu0 %147
    %v151 = vperm.slane %v33, 0
    %v153 = vmul.f32 %v120, %v151
    %v154 = vmul.f32 %v124, %v151
    %v155 = vmul.f32 %v128, %v151
    %v156 = vmul.f32 %v132, %v151
    %v157 = vmul.f32 %v136, %v151
    %v158 = vmul.f32 %v140, %v151
    %v159 = vmul.f32 %v144, %v151
    %v160 = vmul.f32 %v148, %v151
    %v161 = vadd.f32 %v110, %v153
    %v162 = vadd.f32 %v111, %v154
    %v163 = vadd.f32 %v112, %v155
    %v164 = vadd.f32 %v113, %v156
    %v165 = vadd.f32 %v114, %v157
    %v166 = vadd.f32 %v115, %v158
    %v167 = vadd.f32 %v116, %v159
    %v168 = vadd.f32 %v117, %v160
    %170 = vset.pattern.permute.xlu0 0
    %171 = vperm.xlu0 %170, %v42
    %v172 = vpop.permute.xlu0 %171
    %175 = vset.pattern.permute.xlu0 0
    %176 = vperm.xlu0 %175, %v43
    %v177 = vpop.permute.xlu0 %176
    %180 = vset.pattern.permute.xlu0 0
    %181 = vperm.xlu0 %180, %v44
    %v182 = vpop.permute.xlu0 %181
    %185 = vset.pattern.permute.xlu0 0
    %186 = vperm.xlu0 %185, %v45
    %v187 = vpop.permute.xlu0 %186
    %190 = vset.pattern.permute.xlu0 0
    %191 = vperm.xlu0 %190, %v46
    %v192 = vpop.permute.xlu0 %191
    %195 = vset.pattern.permute.xlu0 0
    %196 = vperm.xlu0 %195, %v47
    %v197 = vpop.permute.xlu0 %196
    %200 = vset.pattern.permute.xlu0 0
    %201 = vperm.xlu0 %200, %v48
    %v202 = vpop.permute.xlu0 %201
    %205 = vset.pattern.permute.xlu0 0
    %206 = vperm.xlu0 %205, %v49
    %v207 = vpop.permute.xlu0 %206
    %v209 = vadd.f32 %v161, %v172
    %v210 = vadd.f32 %v162, %v177
    %v211 = vadd.f32 %v163, %v182
    %v212 = vadd.f32 %v164, %v187
    %v213 = vadd.f32 %v165, %v192
    %v214 = vadd.f32 %v166, %v197
    %v215 = vadd.f32 %v167, %v202
    %v216 = vadd.f32 %v168, %v207
    %v217 = vtanh.pop %v209
    %v218 = vtanh.pop %v210
    %v219 = vtanh.pop %v211
    %v220 = vtanh.pop %v212
    %v221 = vtanh.pop %v213
    %v222 = vtanh.pop %v214
    %v223 = vtanh.pop %v215
    %v224 = vtanh.pop %v216
    %v225 = vld [vmem:[%s4] sm:$0xff]
    %v226 = vld [vmem:[%s4 + $0x8] sm:$0xff]
    %v227 = vld [vmem:[%s4 + $0x10] sm:$0xff]
    %v228 = vld [vmem:[%s4 + $0x18] sm:$0xff]
    %v229 = vld [vmem:[%s4 + $0x20] sm:$0xff]
    %v230 = vld [vmem:[%s4 + $0x28] sm:$0xff]
    %v231 = vld [vmem:[%s4 + $0x30] sm:$0xff]
    %v232 = vld [vmem:[%s4 + $0x38] sm:$0xff]
    %234 = vset.pattern.permute.xlu0 0
    %235 = vperm.xlu0 %234, %v50
    %v236 = vpop.permute.xlu0 %235
    %239 = vset.pattern.permute.xlu0 0
    %240 = vperm.xlu0 %239, %v51
    %v241 = vpop.permute.xlu0 %240
    %244 = vset.pattern.permute.xlu0 0
    %245 = vperm.xlu0 %244, %v52
    %v246 = vpop.permute.xlu0 %245
    %249 = vset.pattern.permute.xlu0 0
    %250 = vperm.xlu0 %249, %v53
    %v251 = vpop.permute.xlu0 %250
    %254 = vset.pattern.permute.xlu0 0
    %255 = vperm.xlu0 %254, %v54
    %v256 = vpop.permute.xlu0 %255
    %259 = vset.pattern.permute.xlu0 0
    %260 = vperm.xlu0 %259, %v55
    %v261 = vpop.permute.xlu0 %260
    %264 = vset.pattern.permute.xlu0 0
    %265 = vperm.xlu0 %264, %v56
    %v266 = vpop.permute.xlu0 %265
    %269 = vset.pattern.permute.xlu0 0
    %270 = vperm.xlu0 %269, %v57
    %v271 = vpop.permute.xlu0 %270
    %vm273 = vcmask 523264
    %v275 = vsel %vm273, %v225, 0
    %v278 = vsel %vm273, %v226, 0
    %v281 = vsel %vm273, %v227, 0
    %v284 = vsel %vm273, %v228, 0
    %v287 = vsel %vm273, %v229, 0
    %v290 = vsel %vm273, %v230, 0
    %v293 = vsel %vm273, %v231, 0
    %v296 = vsel %vm273, %v232, 0
    %298 = vmatpush.msra.mxu0 0.0
    %299 = vmatpush.msra.mxu0 0.0
    %300 = vmatpush.msra.mxu0 0.0
    %301 = vmatpush.msra.mxu0 0.0
    %302 = vmatpush.msra.mxu0 0.0
    %303 = vmatpush.msra.mxu0 0.0
    %304 = vmatpush.msra.mxu0 0.0
    %305 = vmatpush.msra.mxu0 0.0
    %306 = vmatpush.msra.mxu0 %v224
    %307 = vmatpush.msra.mxu0 %v223
    %308 = vmatpush.msra.mxu0 %v222
    %309 = vmatpush.msra.mxu0 %v221
    %310 = vmatpush.msra.mxu0 %v220
    %311 = vmatpush.msra.mxu0 %v219
    %312 = vmatpush.msra.mxu0 %v218
    %313 = vmatpush.msra.mxu0 %v217
    %314 = vmatmul.f32.gmra.mxu0 %v275
    %v315 = vpop.f32.mrf.mxu0
    %v316 = vadd.f32 %v236, %v315
    %317 = vmatmul.f32.gmra.mxu0 %v278
    %v318 = vpop.f32.mrf.mxu0
    %v319 = vadd.f32 %v241, %v318
    %320 = vmatmul.f32.gmra.mxu0 %v281
    %v321 = vpop.f32.mrf.mxu0
    %v322 = vadd.f32 %v246, %v321
    %323 = vmatmul.f32.gmra.mxu0 %v284
    %v324 = vpop.f32.mrf.mxu0
    %v325 = vadd.f32 %v251, %v324
    %326 = vmatmul.f32.gmra.mxu0 %v287
    %v327 = vpop.f32.mrf.mxu0
    %v328 = vadd.f32 %v256, %v327
    %329 = vmatmul.f32.gmra.mxu0 %v290
    %v330 = vpop.f32.mrf.mxu0
    %v331 = vadd.f32 %v261, %v330
    %332 = vmatmul.f32.gmra.mxu0 %v293
    %v333 = vpop.f32.mrf.mxu0
    %v334 = vadd.f32 %v266, %v333
    %335 = vmatmul.f32.gmra.mxu0 %v296
    %v336 = vpop.f32.mrf.mxu0
    %v337 = vadd.f32 %v271, %v336
    %338 = vdwg.mxu0
    %v339 = vtanh.pop %v316
    %v340 = vtanh.pop %v319
    %v341 = vtanh.pop %v322
    %v342 = vtanh.pop %v325
    %v343 = vtanh.pop %v328
    %v344 = vtanh.pop %v331
    %v345 = vtanh.pop %v334
    %v346 = vtanh.pop %v337
    %348 = vset.pattern.permute.xlu0 0
    %349 = vperm.xlu0 %348, %v58
    %v350 = vpop.permute.xlu0 %349
    %353 = vset.pattern.permute.xlu0 0
    %354 = vperm.xlu0 %353, %v59
    %v355 = vpop.permute.xlu0 %354
    %358 = vset.pattern.permute.xlu0 0
    %359 = vperm.xlu0 %358, %v60
    %v360 = vpop.permute.xlu0 %359
    %363 = vset.pattern.permute.xlu0 0
    %364 = vperm.xlu0 %363, %v61
    %v365 = vpop.permute.xlu0 %364
    %368 = vset.pattern.permute.xlu0 0
    %369 = vperm.xlu0 %368, %v62
    %v370 = vpop.permute.xlu0 %369
    %373 = vset.pattern.permute.xlu0 0
    %374 = vperm.xlu0 %373, %v63
    %v375 = vpop.permute.xlu0 %374
    %378 = vset.pattern.permute.xlu0 0
    %379 = vperm.xlu0 %378, %v64
    %v380 = vpop.permute.xlu0 %379
    %383 = vset.pattern.permute.xlu0 0
    %384 = vperm.xlu0 %383, %v65
    %v385 = vpop.permute.xlu0 %384
    %v387 = vmul.f32 %v350, %v339
    %v388 = vmul.f32 %v355, %v340
    %v389 = vmul.f32 %v360, %v341
    %v390 = vmul.f32 %v365, %v342
    %v391 = vmul.f32 %v370, %v343
    %v392 = vmul.f32 %v375, %v344
    %v393 = vmul.f32 %v380, %v345
    %v394 = vmul.f32 %v385, %v346
    %v395 = vadd.f32 %v387, %v388
    %v396 = vadd.f32 %v395, %v389
    %v397 = vadd.f32 %v396, %v390
    %v398 = vadd.f32 %v397, %v391
    %v399 = vadd.f32 %v398, %v392
    %v400 = vadd.f32 %v399, %v393
    %v401 = vadd.f32 %v400, %v394
    %v402 = vrot.slane %v401, 4
    %v403 = vadd.f32 %v401, %v402
    %v404 = vrot.slane %v403, 2
    %v405 = vadd.f32 %v403, %v404
    %v406 = vrot.slane %v405, 1
    %v407 = vadd.f32 %v405, %v406
    %409 = vset.pattern.permute.xlu0 0
    %410 = vperm.xlu0 %409, %v66
    %v411 = vpop.permute.xlu0 %410
    %v413 = vperm.slane %v411, 0
    %v414 = vadd.f32 %v407, %v413
    %415 = vst [vmem:[#allocation3] sm:$0x1] %v414
    // Predicated region
    $region34: #{tpu_custom_call.1} parent=1 // pred_check
      _
    $region35: #{tpu_custom_call.1} parent=1 // pred_check_branch
      %417 = sbr.rel (0) target = $region37
    $region36: #{tpu_custom_call.1} parent=1 // pred_region
      %419 = vsyncadd [#allocation4], 0
      %s421 = sshll.u32 [#allocation3], 4
      %s422 = int_to_ptr.vmem [resolvable:$true] %s421
      %s423 = sshll.u32 %s8, 4
      %s424 = int_to_ptr.hbm [resolvable:$true] %s423
      %426 = dma.vmem_to_hbm [thread:$0]  %s422, 16, %s424, [#allocation4]
    $region37: #{tpu_custom_call.1} parent=1 // pred_fallthru
      _
    // Predicated region
    $region38: #{tpu_custom_call.1} parent=1 // pred_check
      _
    $region39: #{tpu_custom_call.1} parent=1 // pred_check_branch
      %428 = sbr.rel (0) target = $region41
    $region40: #{tpu_custom_call.1} parent=1 // pred_region
      %430 = dma.done [#allocation4], 16
    $region41: #{tpu_custom_call.1} parent=1 // pred_fallthru
      _
    %431 = vsyncpa [#allocation4], 1

</llo_original>
